<compile_context>
chip_gen: v5e
topology: v5e:2x2
jax: 0.10.0
libtpu: 0.0.40
codegen_flags: <defaults>
</compile_context>

<pallas_src>
import jax
import jax.numpy as jnp
from jax.experimental import pallas as pl
from jax.experimental.pallas import tpu as pltpu


def _round_up(x, m):
    return ((x + m - 1) // m) * m


def _cdiv(a, b):
    return -(-a // b)


def _conv_bn_relu_kernel(w_ref, x_ref, b_ref, o_ref):
    # w_ref: (R_out, R_in)   banded conv weight, BN scale folded in (resident)
    # x_ref: (R_in, TILE_N)  input slab: rows = (c_in major, l minor), lanes = batch
    # b_ref: (R_out, 1)      folded conv-bias + BN bias (f32)
    # o_ref: (R_out, TILE_N) rows = (c_out major, l_out minor)
    acc = jnp.dot(w_ref[...], x_ref[...], preferred_element_type=jnp.float32)
    o_ref[...] = jnp.maximum(acc + b_ref[...], 0.0).astype(o_ref.dtype)


def tcn_block_rows(x_rows, weight, conv_bias, gamma, beta, running_mean,
                   running_var, *, stride, dilation, eps=1e-5, tile_n=4096,
                   compute_dtype=jnp.bfloat16, out_dtype=jnp.float32):
    """Conv1d + BN(eval) + ReLU in the "rows" layout.

    x_rows: (C_in*L, N) rows ordered (c_in major, l minor), lanes = batch.
    Returns (C_out*L_out, N_pad) rows ordered (c_out major, l_out minor);
    lanes [0, N) are valid, the rest is padding.
    """
    C_out, C_in, K = weight.shape
    R_in, N = x_rows.shape
    assert R_in % C_in == 0
    L = R_in // C_in
    L_out = (L - dilation * (K - 1) - 1) // stride + 1
    assert L_out > 0
    R_out = C_out * L_out

    f32 = jnp.float32
    # Fold BatchNorm (running stats) + conv bias: scale goes into the weight,
    # the remaining affine term becomes a per-row bias.
    scale = gamma.astype(f32) / jnp.sqrt(running_var.astype(f32) + eps)          # (C_out,)
    bias = beta.astype(f32) + (conv_bias.astype(f32) - running_mean.astype(f32)) * scale
    w_scaled = weight.astype(f32) * scale[:, None, None]                         # (C_out,C_in,K)

    # Banded (Toeplitz) weight: W_big[co*L_out+lo, ci*L+li] = w_scaled[co,ci,k]
    # where li = lo*stride + k*dilation.  Tiny; in a real model precompute once
    # per parameter set instead of per call.
    taps = (jnp.arange(L_out)[:, None] * stride
            + jnp.arange(K)[None, :] * dilation)                                 # (L_out,K)
    onehot = (taps[:, :, None] == jnp.arange(L)[None, None, :]).astype(f32)      # (L_out,K,L)
    w_big = jnp.einsum('cik,okl->coil', w_scaled, onehot)                        # (C_out,L_out,C_in,L)
    w_big = w_big.reshape(R_out, R_in).astype(compute_dtype)
    b_big = jnp.repeat(bias, L_out).reshape(R_out, 1)                            # (R_out,1) f32

    itemsize_cd = jnp.dtype(compute_dtype).itemsize
    itemsize_out = jnp.dtype(out_dtype).itemsize

    # Lane tiling over the batch axis.  Budget the double-buffered x/out tiles
    # plus the resident weight under ~24 MiB (fits v7x's 32 MiB scoped VMEM).
    n128 = _round_up(max(N, 1), 128)
    resident = R_out * R_in * itemsize_cd + R_out * 4
    per_lane = 2 * (R_in * itemsize_cd + R_out * itemsize_out)
    budget = 24 * 1024 * 1024 - resident
    tile_cap = max(128, (budget // max(per_lane, 1)) // 128 * 128)
    tile = min(_round_up(max(tile_n, 128), 128), tile_cap, n128)
    # v7x has 2 TensorCores: keep >= 2 balanced "parallel" grid steps when
    # there is enough work to split.
    if n128 >= 256:
        steps = max(2, _cdiv(n128, tile))
        tile = min(tile, _round_up(_cdiv(n128, steps), 128))
    steps = _cdiv(n128, tile)
    n_pad = steps * tile

    x_pad = jnp.pad(x_rows.astype(compute_dtype), ((0, 0), (0, n_pad - N)))

    flops = 2 * R_out * R_in * n_pad
    bytes_accessed = (x_pad.size * itemsize_cd + w_big.size * itemsize_cd
                      + b_big.size * 4 + R_out * n_pad * itemsize_out)

    out = pl.pallas_call(
        _conv_bn_relu_kernel,
        out_shape=jax.ShapeDtypeStruct((R_out, n_pad), out_dtype),
        grid_spec=pltpu.PrefetchScalarGridSpec(
            num_scalar_prefetch=0,
            grid=(steps,),
            in_specs=[
                pl.BlockSpec((R_out, R_in), lambda i: (0, 0)),   # resident weight
                pl.BlockSpec((R_in, tile), lambda i: (0, i)),    # x lane tile
                pl.BlockSpec((R_out, 1), lambda i: (0, 0)),      # resident bias
            ],
            out_specs=pl.BlockSpec((R_out, tile), lambda i: (0, i)),
        ),
        compiler_params=pltpu.CompilerParams(
            dimension_semantics=("parallel",)),
        cost_estimate=pl.CostEstimate(
            flops=flops, transcendentals=0, bytes_accessed=bytes_accessed),
    )(w_big, x_pad, b_big)
    return out


def tcn_block_forward(x, weight, conv_bias, gamma, beta, running_mean,
                      running_var, *, stride, dilation, eps=1e-5, tile_n=4096,
                      compute_dtype=jnp.bfloat16):
    """Standalone tcn_block.forward (eval mode), NCL in / NCL out.

    x: (N, C_in, L) -> (N, C_out, L_out).
    """
    N, C_in, L = x.shape
    C_out, _, K = weight.shape
    L_out = (L - dilation * (K - 1) - 1) // stride + 1
    # Cast to compute dtype BEFORE any layout work (halves wrapper HBM traffic),
    # then lay out rows = (c_in, l), lanes = batch.
    x_rows = x.astype(compute_dtype).transpose(1, 2, 0).reshape(C_in * L, N)
    out_rows = tcn_block_rows(
        x_rows, weight, conv_bias, gamma, beta, running_mean, running_var,
        stride=stride, dilation=dilation, eps=eps, tile_n=tile_n,
        compute_dtype=compute_dtype, out_dtype=x.dtype)
    # TODO(synk): downstream consumers (block2, the kernel^T matmul in
    # Layer.forward) can consume the (C_out*L_out, N) rows layout directly and
    # skip this transpose; it is kept only to match the nn.Module NCL output.
    out = out_rows[:, :N].reshape(C_out, L_out, N)
    return jnp.transpose(out, (2, 0, 1))


def tcn_networks_forward(x_nvt, params1, params2, *, compute_dtype=jnp.bfloat16):
    """tcn_Networks.forward: (N, V, T) -> (N, V, C_out2*L_out2).

    block1 (1->8, k7, s2) and block2 (8->16, k7, s2) chained in the rows layout
    with NO intermediate transpose (block1's output rows == block2's input rows).
    The defined-but-unused self.fc is not applied (matching the PyTorch forward).
    """
    N, V, T = x_nvt.shape
    B = N * V
    x_rows = (x_nvt.astype(compute_dtype)
              .reshape(B, 1, T).transpose(1, 2, 0).reshape(T, B))
    r1 = tcn_block_rows(x_rows, *params1, stride=2, dilation=1,
                        compute_dtype=compute_dtype, out_dtype=compute_dtype)
    r2 = tcn_block_rows(r1, *params2, stride=2, dilation=1,
                        compute_dtype=compute_dtype, out_dtype=jnp.float32)
    r2 = r2[:, :B]                       # (C_out2*L_out2, B), rows (co major, l minor)
    return r2.T.reshape(N, V, -1)        # matches torch x.view(N, V, -1)


# ----------------------------- references & checks -----------------------------

def _reference_forward(x, weight, conv_bias, gamma, beta, running_mean,
                       running_var, *, stride, dilation, eps=1e-5):
    y = jax.lax.conv_general_dilated(
        x, weight, window_strides=(stride,), padding="VALID",
        rhs_dilation=(dilation,), dimension_numbers=("NCH", "OIH", "NCH"),
    ) + conv_bias[None, :, None]
    scale = gamma / jnp.sqrt(running_var + eps)
    y = (y - running_mean[None, :, None]) * scale[None, :, None] + beta[None, :, None]
    return jnp.maximum(y, 0.0)


def _reference_tcn_networks(x_nvt, params1, params2):
    N, V, T = x_nvt.shape
    x = x_nvt.reshape(N * V, 1, T)
    y1 = _reference_forward(x, *params1, stride=2, dilation=1)
    y2 = _reference_forward(y1, *params2, stride=2, dilation=1)
    return y2.reshape(N, V, -1)


def _make_block_params(key, in_channels, out_channels, kernel_size):
    kw, kb, kg, kbe, km, kv = jax.random.split(key, 6)
    fan_in = in_channels * kernel_size
    bound = 1.0 / (fan_in ** 0.5)
    weight = jax.random.uniform(kw, (out_channels, in_channels, kernel_size),
                                minval=-bound, maxval=bound, dtype=jnp.float32)
    conv_bias = jax.random.uniform(kb, (out_channels,), minval=-bound,
                                   maxval=bound, dtype=jnp.float32)
    gamma = 1.0 + 0.1 * jax.random.normal(kg, (out_channels,), dtype=jnp.float32)
    beta = 0.1 * jax.random.normal(kbe, (out_channels,), dtype=jnp.float32)
    running_mean = 0.1 * jax.random.normal(km, (out_channels,), dtype=jnp.float32)
    running_var = jnp.abs(1.0 + 0.1 * jax.random.normal(kv, (out_channels,),
                                                        dtype=jnp.float32))
    return (weight, conv_bias, gamma, beta, running_mean, running_var)


def _check_block(key, *, in_channels, out_channels, kernel_size, stride,
                 dilation, N, L, compute_dtype, atol, rtol):
    kx, kp = jax.random.split(key)
    x = jax.random.normal(kx, (N, in_channels, L), dtype=jnp.float32)
    params = _make_block_params(kp, in_channels, out_channels, kernel_size)
    out = tcn_block_forward(x, *params, stride=stride, dilation=dilation,
                            compute_dtype=compute_dtype)
    out = jax.block_until_ready(out)
    ref = _reference_forward(x, *params, stride=stride, dilation=dilation)
    assert out.shape == ref.shape, (out.shape, ref.shape)
    err = float(jnp.max(jnp.abs(out - ref)))
    assert jnp.allclose(out, ref, atol=atol, rtol=rtol), err


def _check_networks(key, *, N, V, T, compute_dtype, atol, rtol):
    kx, k1, k2 = jax.random.split(key, 3)
    x = jax.random.normal(kx, (N, V, T), dtype=jnp.float32)
    p1 = _make_block_params(k1, 1, 8, 7)
    p2 = _make_block_params(k2, 8, 16, 7)
    out = tcn_networks_forward(x, p1, p2, compute_dtype=compute_dtype)
    out = jax.block_until_ready(out)
    ref = _reference_tcn_networks(x, p1, p2)
    assert out.shape == ref.shape, (out.shape, ref.shape)
    err = float(jnp.max(jnp.abs(out - ref)))
    assert jnp.allclose(out, ref, atol=atol, rtol=rtol), err


if __name__ == "__main__":
    key = jax.random.PRNGKey(0)
    k1, k2, k3 = jax.random.split(key, 3)

    # 1) Exactness in f32 (generic block, dilation > 1).
    _check_block(k1, in_channels=4, out_channels=8, kernel_size=3, stride=1,
                 dilation=2, N=2, L=16, compute_dtype=jnp.float32,
                 atol=1e-5, rtol=1e-5)

    # 2) Default bf16 path, tcn_Networks.block1 hyperparameters (stride 2).
    _check_block(k2, in_channels=1, out_channels=8, kernel_size=7, stride=2,
                 dilation=1, N=2, L=32, compute_dtype=jnp.bfloat16,
                 atol=5e-2, rtol=5e-2)

    # 3) block1 -> block2 chained in the rows layout (no intermediate
    #    transpose), checked exactly in f32.
    _check_networks(k3, N=2, V=4, T=39, compute_dtype=jnp.float32,
                    atol=1e-5, rtol=1e-5)

    print("KERNEL_OK")
</pallas_src>

<mosaic_0001>
module attributes {stable_mosaic.version = 11 : i64} {
  func.func @_conv_bn_relu_kernel(%arg0: i32, %arg1: memref<96x64xf32, #tpu.memory_space<vmem>>, %arg2: memref<64x128xf32, #tpu.memory_space<vmem>>, %arg3: memref<96x1xf32, #tpu.memory_space<vmem>>, %arg4: memref<96x128xf32, #tpu.memory_space<vmem>>) attributes {dimension_semantics = [#tpu.dimension_semantics<parallel>], iteration_bounds = array<i64: 1>, scalar_prefetch = 0 : i64, scratch_operands = 0 : i64, tpu.core_type = #tpu.core_type<tc>, window_params = [{pipeline_mode = #tpu.pipeline_mode<synchronous>, transform_indices = @transform_0, window_bounds = array<i64: 96, 64>}, {transform_indices = @transform_1, window_bounds = array<i64: 64, 128>}, {pipeline_mode = #tpu.pipeline_mode<synchronous>, transform_indices = @transform_2, window_bounds = array<i64: 96, 1>}, {transform_indices = @transform_3, window_bounds = array<i64: 96, 128>}]} {
    %c0 = arith.constant 0 : index
    %c0_0 = arith.constant 0 : index
    %0 = vector.load %arg1[%c0, %c0_0] : memref<96x64xf32, #tpu.memory_space<vmem>>, vector<96x64xf32>
    %c0_1 = arith.constant 0 : index
    %c0_2 = arith.constant 0 : index
    %1 = vector.load %arg2[%c0_1, %c0_2] : memref<64x128xf32, #tpu.memory_space<vmem>>, vector<64x128xf32>
    %cst = arith.constant dense<0.000000e+00> : vector<96x128xf32>
    %2 = tpu.matmul %0, %1, %cst {dimension_numbers = #tpu.dot_dimension_numbers<[1], [0], [0], [1], [0, 0, 1, 1], [], []>} : vector<96x64xf32>, vector<64x128xf32>, vector<96x128xf32> -> vector<96x128xf32>
    %c0_3 = arith.constant 0 : index
    %c0_4 = arith.constant 0 : index
    %3 = vector.load %arg3[%c0_3, %c0_4] : memref<96x1xf32, #tpu.memory_space<vmem>>, vector<96x1xf32>
    %4 = vector.broadcast %3 : vector<96x1xf32> to vector<96x128xf32>
    %5 = arith.addf %2, %4 : vector<96x128xf32>
    %cst_5 = arith.constant 0.000000e+00 : f32
    %6 = vector.broadcast %cst_5 : f32 to vector<96x128xf32>
    %7 = arith.maximumf %5, %6 : vector<96x128xf32>
    %c0_6 = arith.constant 0 : index
    %c0_7 = arith.constant 0 : index
    %8 = vector.load %arg4[%c0_6, %c0_7] : memref<96x128xf32, #tpu.memory_space<vmem>>, vector<96x128xf32>
    tpu.vector_store %arg4[%c0_6, %c0_7], %7 {strides = array<i32>} : memref<96x128xf32, #tpu.memory_space<vmem>>, vector<96x128xf32>,
    return
  }
  func.func @transform_0(%arg0: i32) -> (i32, i32) {
    %c0_i32 = arith.constant 0 : i32
    %c0_i32_0 = arith.constant 0 : i32
    %c0_i32_1 = arith.constant 0 : i32
    return %c0_i32, %c0_i32_0 : i32, i32
  }
  func.func @transform_1(%arg0: i32) -> (i32, i32) {
    %c0_i32 = arith.constant 0 : i32
    %c0_i32_0 = arith.constant 0 : i32
    return %c0_i32, %arg0 : i32, i32
  }
  func.func @transform_2(%arg0: i32) -> (i32, i32) {
    %c0_i32 = arith.constant 0 : i32
    %c0_i32_0 = arith.constant 0 : i32
    %c0_i32_1 = arith.constant 0 : i32
    return %c0_i32, %c0_i32_0 : i32, i32
  }
  func.func @transform_3(%arg0: i32) -> (i32, i32) {
    %c0_i32 = arith.constant 0 : i32
    %c0_i32_0 = arith.constant 0 : i32
    return %c0_i32, %arg0 : i32, i32
  }
}

</mosaic_0001>

<llo_original>
// kernel: tpu_custom_call.1
$region0: #{tpu_custom_call.1}
  #allocation0 [shape = 'u32[]', space=smem, size = 0x4, offset = 0x4, fixed_abs, tag = 'smem constant byte address 0x4 - core index']
  #allocation1 [shape = 'u32[72,128]{1,0:T(1,128)}', space=vmem, size = 0x9000, scoped, tag = 'internal scratch']
  %s0 = inlined_call_operand.vmem [shape: f32[96,64], index: 0, kind: input, shape index: {}]
  %s1 = inlined_call_operand.vmem [shape: f32[64,128], index: 1, kind: input, shape index: {}]
  %s2 = inlined_call_operand.vmem [shape: f32[96,1], index: 2, kind: input, shape index: {}]
  %s3 = inlined_call_operand.hbm [shape: f32[96,128], index: 3, kind: output, shape index: {}]
  %s4 = sld [smem:[#allocation0]]
  $region22: #{tpu_custom_call.1} parent=0
    _
  %s6 = ssub.s32 1, %s4
  %s7 = scalar_select 0, %s6, %s4
  $region1: #{tpu_custom_call.1} parent=0
    #allocation2 [shape = 'u8[49152]{0}', space=vmem, size = 0xc000, scoped, tag = 'output window, operand 0, single buffered']
    #allocation3 [shape = 's32[1]{0}', space=sflag, size = 0x4, scoped, tag = 'scoped memory for tpu_custom_call.1']
    %8 = vsyncpa [#allocation3], 0
    // Predicated region
    $region2: #{tpu_custom_call.1} parent=1 // pred_check
      _
    $region3: #{tpu_custom_call.1} parent=1 // pred_check_branch
      %10 = sbr.rel (0) target = $region5
    $region4: #{tpu_custom_call.1} parent=1 // pred_region
      _
    $region5: #{tpu_custom_call.1} parent=1 // pred_fallthru
      _
    // Predicated region
    $region6: #{tpu_custom_call.1} parent=1 // pred_check
      _
    $region7: #{tpu_custom_call.1} parent=1 // pred_check_branch
      %12 = sbr.rel (0) target = $region9
    $region8: #{tpu_custom_call.1} parent=1 // pred_region
      _
    $region9: #{tpu_custom_call.1} parent=1 // pred_fallthru
      _
    // Predicated region
    $region10: #{tpu_custom_call.1} parent=1 // pred_check
      _
    $region11: #{tpu_custom_call.1} parent=1 // pred_check_branch
      %14 = sbr.rel (0) target = $region13
    $region12: #{tpu_custom_call.1} parent=1 // pred_region
      _
    $region13: #{tpu_custom_call.1} parent=1 // pred_fallthru
      _
    %v15 = vld [vmem:[%s0] sm:$0xff]
    %v16 = vld [vmem:[%s0 + $0x8] sm:$0xff]
    %v17 = vld [vmem:[%s0 + $0x10] sm:$0xff]
    %v18 = vld [vmem:[%s0 + $0x18] sm:$0xff]
    %v19 = vld [vmem:[%s0 + $0x20] sm:$0xff]
    %v20 = vld [vmem:[%s0 + $0x28] sm:$0xff]
    %v21 = vld [vmem:[%s0 + $0x30] sm:$0xff]
    %v22 = vld [vmem:[%s0 + $0x38] sm:$0xff]
    %v23 = vld [vmem:[%s0 + $0x40] sm:$0xff]
    %v24 = vld [vmem:[%s0 + $0x48] sm:$0xff]
    %v25 = vld [vmem:[%s0 + $0x50] sm:$0xff]
    %v26 = vld [vmem:[%s0 + $0x58] sm:$0xff]
    %v27 = vld [vmem:[%s1] sm:$0xff]
    %v28 = vld [vmem:[%s1 + $0x8] sm:$0xff]
    %v29 = vld [vmem:[%s1 + $0x10] sm:$0xff]
    %v30 = vld [vmem:[%s1 + $0x18] sm:$0xff]
    %v31 = vld [vmem:[%s1 + $0x20] sm:$0xff]
    %v32 = vld [vmem:[%s1 + $0x28] sm:$0xff]
    %v33 = vld [vmem:[%s1 + $0x30] sm:$0xff]
    %v34 = vld [vmem:[%s1 + $0x38] sm:$0xff]
    %v35 = vld [vmem:[%s2] sm:$0xff]
    %v36 = vld [vmem:[%s2 + $0x8] sm:$0xff]
    %v37 = vld [vmem:[%s2 + $0x10] sm:$0xff]
    %v38 = vld [vmem:[%s2 + $0x18] sm:$0xff]
    %v39 = vld [vmem:[%s2 + $0x20] sm:$0xff]
    %v40 = vld [vmem:[%s2 + $0x28] sm:$0xff]
    %v41 = vld [vmem:[%s2 + $0x30] sm:$0xff]
    %v42 = vld [vmem:[%s2 + $0x38] sm:$0xff]
    %v43 = vld [vmem:[%s2 + $0x40] sm:$0xff]
    %v44 = vld [vmem:[%s2 + $0x48] sm:$0xff]
    %v45 = vld [vmem:[%s2 + $0x50] sm:$0xff]
    %v46 = vld [vmem:[%s2 + $0x58] sm:$0xff]
    %48 = vset.pattern.permute.xlu0 0
    %49 = vperm.xlu0 %48, %v35
    %v50 = vpop.permute.xlu0 %49
    %53 = vset.pattern.permute.xlu0 0
    %54 = vperm.xlu0 %53, %v36
    %v55 = vpop.permute.xlu0 %54
    %58 = vset.pattern.permute.xlu0 0
    %59 = vperm.xlu0 %58, %v37
    %v60 = vpop.permute.xlu0 %59
    %63 = vset.pattern.permute.xlu0 0
    %64 = vperm.xlu0 %63, %v38
    %v65 = vpop.permute.xlu0 %64
    %68 = vset.pattern.permute.xlu0 0
    %69 = vperm.xlu0 %68, %v39
    %v70 = vpop.permute.xlu0 %69
    %73 = vset.pattern.permute.xlu0 0
    %74 = vperm.xlu0 %73, %v40
    %v75 = vpop.permute.xlu0 %74
    %78 = vset.pattern.permute.xlu0 0
    %79 = vperm.xlu0 %78, %v41
    %v80 = vpop.permute.xlu0 %79
    %83 = vset.pattern.permute.xlu0 0
    %84 = vperm.xlu0 %83, %v42
    %v85 = vpop.permute.xlu0 %84
    %88 = vset.pattern.permute.xlu0 0
    %89 = vperm.xlu0 %88, %v43
    %v90 = vpop.permute.xlu0 %89
    %93 = vset.pattern.permute.xlu0 0
    %94 = vperm.xlu0 %93, %v44
    %v95 = vpop.permute.xlu0 %94
    %98 = vset.pattern.permute.xlu0 0
    %99 = vperm.xlu0 %98, %v45
    %v100 = vpop.permute.xlu0 %99
    %103 = vset.pattern.permute.xlu0 0
    %104 = vperm.xlu0 %103, %v46
    %v105 = vpop.permute.xlu0 %104
    %vm107 = vcmask 523264
    %v109 = vsel %vm107, %v15, 0
    %v112 = vsel %vm107, %v16, 0
    %v115 = vsel %vm107, %v17, 0
    %v118 = vsel %vm107, %v18, 0
    %v121 = vsel %vm107, %v19, 0
    %v124 = vsel %vm107, %v20, 0
    %v127 = vsel %vm107, %v21, 0
    %v130 = vsel %vm107, %v22, 0
    %v133 = vsel %vm107, %v23, 0
    %v136 = vsel %vm107, %v24, 0
    %v139 = vsel %vm107, %v25, 0
    %v142 = vsel %vm107, %v26, 0
    %144 = vmatpush.msra.mxu0 0.0
    %145 = vmatpush.msra.mxu0 0.0
    %146 = vmatpush.msra.mxu0 0.0
    %147 = vmatpush.msra.mxu0 0.0
    %148 = vmatpush.msra.mxu0 0.0
    %149 = vmatpush.msra.mxu0 0.0
    %150 = vmatpush.msra.mxu0 0.0
    %151 = vmatpush.msra.mxu0 0.0
    %152 = vmatpush.msra.mxu0 %v34
    %153 = vmatpush.msra.mxu0 %v33
    %154 = vmatpush.msra.mxu0 %v32
    %155 = vmatpush.msra.mxu0 %v31
    %156 = vmatpush.msra.mxu0 %v30
    %157 = vmatpush.msra.mxu0 %v29
    %158 = vmatpush.msra.mxu0 %v28
    %159 = vmatpush.msra.mxu0 %v27
    %160 = vmatmul.f32.gmra.mxu0 %v109
    %v161 = vpop.f32.mrf.mxu0
    %v162 = vadd.f32 %v50, %v161
    %163 = vmatmul.f32.gmra.mxu0 %v112
    %v164 = vpop.f32.mrf.mxu0
    %v165 = vadd.f32 %v55, %v164
    %166 = vmatmul.f32.gmra.mxu0 %v115
    %v167 = vpop.f32.mrf.mxu0
    %v168 = vadd.f32 %v60, %v167
    %169 = vmatmul.f32.gmra.mxu0 %v118
    %v170 = vpop.f32.mrf.mxu0
    %v171 = vadd.f32 %v65, %v170
    %172 = vmatmul.f32.gmra.mxu0 %v121
    %v173 = vpop.f32.mrf.mxu0
    %v174 = vadd.f32 %v70, %v173
    %175 = vmatmul.f32.gmra.mxu0 %v124
    %v176 = vpop.f32.mrf.mxu0
    %v177 = vadd.f32 %v75, %v176
    %178 = vmatmul.f32.gmra.mxu0 %v127
    %v179 = vpop.f32.mrf.mxu0
    %v180 = vadd.f32 %v80, %v179
    %181 = vmatmul.f32.gmra.mxu0 %v130
    %v182 = vpop.f32.mrf.mxu0
    %v183 = vadd.f32 %v85, %v182
    %184 = vmatmul.f32.gmra.mxu0 %v133
    %v185 = vpop.f32.mrf.mxu0
    %v186 = vadd.f32 %v90, %v185
    %187 = vmatmul.f32.gmra.mxu0 %v136
    %v188 = vpop.f32.mrf.mxu0
    %v189 = vadd.f32 %v95, %v188
    %190 = vmatmul.f32.gmra.mxu0 %v139
    %v191 = vpop.f32.mrf.mxu0
    %v192 = vadd.f32 %v100, %v191
    %193 = vmatmul.f32.gmra.mxu0 %v142
    %v194 = vpop.f32.mrf.mxu0
    %v195 = vadd.f32 %v105, %v194
    %196 = vdwg.mxu0
    %v197 = vmax.f32 %v162, 0.0
    %v198 = vmax.f32 %v165, 0.0
    %v199 = vmax.f32 %v168, 0.0
    %v200 = vmax.f32 %v171, 0.0
    %v201 = vmax.f32 %v174, 0.0
    %v202 = vmax.f32 %v177, 0.0
    %v203 = vmax.f32 %v180, 0.0
    %v204 = vmax.f32 %v183, 0.0
    %v205 = vmax.f32 %v186, 0.0
    %v206 = vmax.f32 %v189, 0.0
    %v207 = vmax.f32 %v192, 0.0
    %v208 = vmax.f32 %v195, 0.0
    %209 = vst [vmem:[#allocation2] sm:$0xff] %v197
    %210 = vst [vmem:[#allocation2 + $0x8] sm:$0xff] %v198
    %211 = vst [vmem:[#allocation2 + $0x10] sm:$0xff] %v199
    %212 = vst [vmem:[#allocation2 + $0x18] sm:$0xff] %v200
    %213 = vst [vmem:[#allocation2 + $0x20] sm:$0xff] %v201
    %214 = vst [vmem:[#allocation2 + $0x28] sm:$0xff] %v202
    %215 = vst [vmem:[#allocation2 + $0x30] sm:$0xff] %v203
    %216 = vst [vmem:[#allocation2 + $0x38] sm:$0xff] %v204
    %217 = vst [vmem:[#allocation2 + $0x40] sm:$0xff] %v205
    %218 = vst [vmem:[#allocation2 + $0x48] sm:$0xff] %v206
    %219 = vst [vmem:[#allocation2 + $0x50] sm:$0xff] %v207
    %220 = vst [vmem:[#allocation2 + $0x58] sm:$0xff] %v208
    // Predicated region
    $region14: #{tpu_custom_call.1} parent=1 // pred_check
      _
    $region15: #{tpu_custom_call.1} parent=1 // pred_check_branch
      %222 = sbr.rel (0) target = $region17
    $region16: #{tpu_custom_call.1} parent=1 // pred_region
      %224 = vsyncadd [#allocation3], 0
      %s225 = sshll.u32 [#allocation2], 4
      %s226 = int_to_ptr.vmem [resolvable:$true] %s225
      %s227 = sshll.u32 %s3, 4
      %s228 = int_to_ptr.hbm [resolvable:$true] %s227
      %233 = dma.vmem_to_hbm [thread:$0]  %s226, 1536, %s228, [#allocation3], 128, 128, 8
    $region17: #{tpu_custom_call.1} parent=1 // pred_fallthru
      _
    // Predicated region
    $region18: #{tpu_custom_call.1} parent=1 // pred_check
      _
    $region19: #{tpu_custom_call.1} parent=1 // pred_check_branch
      %235 = sbr.rel (0) target = $region21
    $region20: #{tpu_custom_call.1} parent=1 // pred_region
      %237 = dma.done [#allocation3], 1536
    $region21: #{tpu_custom_call.1} parent=1 // pred_fallthru
      _
    %238 = vsyncpa [#allocation3], 1

</llo_original>
